<compile_context>
chip_gen: v5e
topology: v5e:2x2
jax: 0.10.0
libtpu: 0.0.40
codegen_flags: <defaults>
</compile_context>

<pallas_src>
import functools
import numpy as np
import jax
import jax.numpy as jnp
from jax.experimental import pallas as pl
from jax.experimental.pallas import tpu as pltpu

_SUBLANE = 16    # bf16 sublane tile -> every static blob slice is tile-aligned
_LANE = 128


def _round_up(x, m):
    return -(-x // m) * m


# ---------------- Fused Pallas kernel: entire forward pass ------------------

def _make_kernel(layout):
    """Build the fused forward kernel with static blob offsets baked in.

    layout: 10 tuples (row_offset, rows, cols) for
            m1, b1, m2, b2, fc1_wT, fc1_b, fc2_wT, fc2_b, fc3_wT, fc3_b.
    """
    m1, b1, m2, b2, w3, b3, w4, b4, w5, b5 = layout

    def view(ref, ent):
        off, r, c = ent
        return ref[off:off + r, 0:c]          # static, tile-aligned slice

    def kernel(x_ref, w_ref, o_ref):
        def layer(h, w_ent, b_ent, relu=True):
            y = jnp.dot(h, view(w_ref, w_ent),
                        preferred_element_type=jnp.float32)
            y = y + view(w_ref, b_ent).astype(jnp.float32)
            return jnp.maximum(y, 0.0) if relu else y

        h = layer(x_ref[...], m1, b1)                         # conv1 + ReLU
        h = layer(h.astype(jnp.bfloat16), m2, b2)             # conv2 + ReLU
        h = layer(h.astype(jnp.bfloat16), w3, b3)             # fc1   + ReLU
        h = layer(h.astype(jnp.bfloat16), w4, b4)             # fc2   + ReLU
        o_ref[...] = layer(h.astype(jnp.bfloat16), w5, b5, relu=False)  # fc3

    return kernel


@functools.partial(jax.jit, static_argnames=("layout", "block_rows"))
def cntr_forward(x, blob, *, layout, block_rows=256):
    """x: (B, 2, 5, 5) NCHW float32; blob/layout from prepack_params."""
    B = x.shape[0]
    K = x.shape[1] * x.shape[2] * x.shape[3]            # 50
    n_out = layout[-1][2]                               # 4
    x2d = x.reshape(B, K).astype(jnp.bfloat16)          # contiguous + bf16

    # Pad the batch so the row-block grid tiles it exactly (>= one sublane tile).
    if B <= block_rows:
        tm = _round_up(max(B, _SUBLANE), _SUBLANE)
        Bp = tm
    else:
        tm = block_rows
        Bp = _round_up(B, tm)
    if Bp != B:
        x2d = jnp.pad(x2d, ((0, Bp - B), (0, 0)))

    rows, cols = blob.shape
    flops = int(2 * Bp * sum(r * c for (_, r, c) in layout[0::2]))
    bytes_accessed = int(Bp * K * 2 + rows * cols * 2 + Bp * n_out * 4)

    out = pl.pallas_call(
        _make_kernel(layout),
        out_shape=jax.ShapeDtypeStruct((Bp, n_out), jnp.float32),
        grid=(Bp // tm,),
        in_specs=[pl.BlockSpec((tm, K), lambda i: (i, 0)),     # batch tile
                  pl.BlockSpec((rows, cols), lambda i: (0, 0))],  # resident weights
        out_specs=pl.BlockSpec((tm, n_out), lambda i: (i, 0)),
        compiler_params=pltpu.CompilerParams(
            dimension_semantics=("parallel",)),
        cost_estimate=pl.CostEstimate(flops=flops, transcendentals=0,
                                      bytes_accessed=bytes_accessed),
    )(x2d, blob)
    return out[:B]


# ---------------- One-time weight prepacking (host-side, outside jit) -------

def _conv_as_matmul(w, H, W):
    """Lower a stride-1 'VALID' conv (PyTorch cross-correlation) to a matmul.

    w: (Cout, Cin, kh, kw).  Returns M of shape (Cin*H*W, Cout*Ho*Wo) so that
    for x flattened NCHW (B, Cin*H*W):  (x @ M)[b, oc*Ho*Wo + i*Wo + j]
    == conv2d(x, w)[b, oc, i, j].
    """
    w = np.asarray(w, np.float32)
    Cout, Cin, kh, kw = w.shape
    Ho, Wo = H - kh + 1, W - kw + 1
    M = np.zeros((Cin, H, W, Cout, Ho, Wo), np.float32)
    for d in range(kh):
        for e in range(kw):
            for i in range(Ho):
                for j in range(Wo):
                    M[:, i + d, j + e, :, i, j] += w[:, :, d, e].T
    return M.reshape(Cin * H * W, Cout * Ho * Wo)


def prepack_params(params, H=5, W=5):
    """Pack all weights/biases into one bf16 blob with tile-aligned offsets."""
    w1, b1, w2, b2, fw1, fb1, fw2, fb2, fw3, fb3 = [
        np.asarray(p, np.float32) for p in params]
    kh = w1.shape[2]
    H1, W1 = H - kh + 1, W - kh + 1        # after conv1
    H2, W2 = H1 - kh + 1, W1 - kh + 1      # after conv2

    mats = [
        _conv_as_matmul(w1, H, W),                  # (50, 96)
        np.repeat(b1, H1 * W1).reshape(1, -1),      # (1, 96)   NCHW-flat bias
        _conv_as_matmul(w2, H1, W1),                # (96, 144)
        np.repeat(b2, H2 * W2).reshape(1, -1),      # (1, 144)
        fw1.T, fb1.reshape(1, -1),                  # (144,100), (1,100)
        fw2.T, fb2.reshape(1, -1),                  # (100, 40), (1, 40)
        fw3.T, fb3.reshape(1, -1),                  # (40,   4), (1,  4)
    ]
    cols = _round_up(max(m.shape[1] for m in mats), _LANE)   # 256 lanes
    layout, off = [], 0
    for m in mats:
        r, c = m.shape
        layout.append((off, r, c))
        off += _round_up(r, _SUBLANE)
    blob = np.zeros((_round_up(off, _SUBLANE), cols), np.float32)
    for (o, r, c), m in zip(layout, mats):
        blob[o:o + r, :c] = m
    # bf16 storage: MXU default precision is bf16 anyway; halves DMA bytes.
    return jnp.asarray(blob, jnp.bfloat16), tuple(layout)


# ---------------- Deterministic parameter init (torch-style layouts) --------

def init_params(key, final_conv_dim=3):
    ks = jax.random.split(key, 10)

    def u(k, shape, fan_in):
        bound = 1.0 / float(np.sqrt(fan_in))
        return jax.random.uniform(k, shape, jnp.float32, -bound, bound)

    w1 = u(ks[0], (6, 2, 2, 2), 2 * 2 * 2)
    b1 = u(ks[1], (6,), 2 * 2 * 2)
    w2 = u(ks[2], (16, 6, 2, 2), 6 * 2 * 2)
    b2 = u(ks[3], (16,), 6 * 2 * 2)
    d = 16 * final_conv_dim * final_conv_dim
    fw1 = u(ks[4], (100, d), d)
    fb1 = u(ks[5], (100,), d)
    fw2 = u(ks[6], (40, 100), 100)
    fb2 = u(ks[7], (40,), 100)
    fw3 = u(ks[8], (4, 40), 40)
    fb3 = u(ks[9], (4,), 40)
    return (w1, b1, w2, b2, fw1, fb1, fw2, fb2, fw3, fb3)


# ---------------- Pure-JAX reference (for correctness check) ----------------

def ref_forward(x, params):
    w1, b1, w2, b2, fw1, fb1, fw2, fb2, fw3, fb3 = params
    dn = ('NCHW', 'OIHW', 'NCHW')
    y = jax.lax.conv_general_dilated(x, w1, (1, 1), 'VALID', dimension_numbers=dn)
    y = jnp.maximum(y + b1[None, :, None, None], 0.0)
    y = jax.lax.conv_general_dilated(y, w2, (1, 1), 'VALID', dimension_numbers=dn)
    y = jnp.maximum(y + b2[None, :, None, None], 0.0)
    y = y.reshape(y.shape[0], -1)
    y = jnp.maximum(y @ fw1.T + fb1, 0.0)
    y = jnp.maximum(y @ fw2.T + fb2, 0.0)
    return y @ fw3.T + fb3


if __name__ == "__main__":
    key = jax.random.PRNGKey(0)
    k_x, k_x2, k_p = jax.random.split(key, 3)

    params = init_params(k_p, final_conv_dim=3)
    blob, layout = prepack_params(params)          # one-time host-side prepack
    blob = jax.block_until_ready(blob)

    # Small batch (spec-sized): batch=2, 2 input channels, 5x5 spatial.
    x = jax.random.normal(k_x, (2, 2, 5, 5), jnp.float32)
    out = jax.block_until_ready(cntr_forward(x, blob, layout=layout))
    assert out.shape == (2, 4), out.shape
    ref = jax.block_until_ready(ref_forward(x, params))
    # bf16 weight/activation storage => compare at bf16-level tolerance
    # (MXU default precision truncates f32 to bf16 anyway).
    np.testing.assert_allclose(np.asarray(out), np.asarray(ref),
                               rtol=2e-2, atol=2e-2)

    # Larger batch exercises batch padding + the 2-step "parallel" row grid.
    xb = jax.random.normal(k_x2, (300, 2, 5, 5), jnp.float32)
    outb = jax.block_until_ready(cntr_forward(xb, blob, layout=layout))
    assert outb.shape == (300, 4), outb.shape
    refb = jax.block_until_ready(ref_forward(xb, params))
    np.testing.assert_allclose(np.asarray(outb), np.asarray(refb),
                               rtol=2e-2, atol=2e-2)

    print("KERNEL_OK")
</pallas_src>

<mosaic_0001>
module attributes {stable_mosaic.version = 11 : i64} {
  func.func @kernel(%arg0: i32, %arg1: memref<16x50xbf16, #tpu.memory_space<vmem>>, %arg2: memref<544x256xbf16, #tpu.memory_space<vmem>>, %arg3: memref<16x4xf32, #tpu.memory_space<vmem>>) attributes {dimension_semantics = [#tpu.dimension_semantics<parallel>], iteration_bounds = array<i64: 1>, scalar_prefetch = 0 : i64, scratch_operands = 0 : i64, tpu.core_type = #tpu.core_type<tc>, window_params = [{transform_indices = @transform_0, window_bounds = array<i64: 16, 50>}, {pipeline_mode = #tpu.pipeline_mode<synchronous>, transform_indices = @transform_1, window_bounds = array<i64: 544, 256>}, {transform_indices = @transform_2, window_bounds = array<i64: 16, 4>}]} {
    %c0 = arith.constant 0 : index
    %c0_0 = arith.constant 0 : index
    %0 = vector.load %arg1[%c0, %c0_0] : memref<16x50xbf16, #tpu.memory_space<vmem>>, vector<16x50xbf16>
    %c0_1 = arith.constant 0 : index
    %c0_2 = arith.constant 0 : index
    %1 = vector.load %arg2[%c0_1, %c0_2] : memref<544x256xbf16, #tpu.memory_space<vmem>>, vector<50x96xbf16>
    %cst = arith.constant dense<0.000000e+00> : vector<16x96xf32>
    %2 = tpu.matmul %0, %1, %cst {dimension_numbers = #tpu.dot_dimension_numbers<[1], [0], [0], [1], [0, 0, 1, 1], [], []>} : vector<16x50xbf16>, vector<50x96xbf16>, vector<16x96xf32> -> vector<16x96xf32>
    %c64 = arith.constant 64 : index
    %c0_3 = arith.constant 0 : index
    %3 = vector.load %arg2[%c64, %c0_3] : memref<544x256xbf16, #tpu.memory_space<vmem>>, vector<1x96xbf16>
    %4 = arith.extf %3 : vector<1x96xbf16> to vector<1x96xf32>
    %5 = vector.broadcast %4 : vector<1x96xf32> to vector<16x96xf32>
    %6 = arith.addf %2, %5 : vector<16x96xf32>
    %cst_4 = arith.constant 0.000000e+00 : f32
    %7 = vector.broadcast %cst_4 : f32 to vector<16x96xf32>
    %8 = arith.maximumf %6, %7 : vector<16x96xf32>
    %9 = arith.truncf %8 : vector<16x96xf32> to vector<16x96xbf16>
    %c80 = arith.constant 80 : index
    %c0_5 = arith.constant 0 : index
    %10 = vector.load %arg2[%c80, %c0_5] : memref<544x256xbf16, #tpu.memory_space<vmem>>, vector<96x144xbf16>
    %cst_6 = arith.constant dense<0.000000e+00> : vector<16x144xf32>
    %11 = tpu.matmul %9, %10, %cst_6 {dimension_numbers = #tpu.dot_dimension_numbers<[1], [0], [0], [1], [0, 0, 1, 1], [], []>} : vector<16x96xbf16>, vector<96x144xbf16>, vector<16x144xf32> -> vector<16x144xf32>
    %c176 = arith.constant 176 : index
    %c0_7 = arith.constant 0 : index
    %12 = vector.load %arg2[%c176, %c0_7] : memref<544x256xbf16, #tpu.memory_space<vmem>>, vector<1x144xbf16>
    %13 = arith.extf %12 : vector<1x144xbf16> to vector<1x144xf32>
    %14 = vector.broadcast %13 : vector<1x144xf32> to vector<16x144xf32>
    %15 = arith.addf %11, %14 : vector<16x144xf32>
    %cst_8 = arith.constant 0.000000e+00 : f32
    %16 = vector.broadcast %cst_8 : f32 to vector<16x144xf32>
    %17 = arith.maximumf %15, %16 : vector<16x144xf32>
    %18 = arith.truncf %17 : vector<16x144xf32> to vector<16x144xbf16>
    %c192 = arith.constant 192 : index
    %c0_9 = arith.constant 0 : index
    %19 = vector.load %arg2[%c192, %c0_9] : memref<544x256xbf16, #tpu.memory_space<vmem>>, vector<144x100xbf16>
    %cst_10 = arith.constant dense<0.000000e+00> : vector<16x100xf32>
    %20 = tpu.matmul %18, %19, %cst_10 {dimension_numbers = #tpu.dot_dimension_numbers<[1], [0], [0], [1], [0, 0, 1, 1], [], []>} : vector<16x144xbf16>, vector<144x100xbf16>, vector<16x100xf32> -> vector<16x100xf32>
    %c336 = arith.constant 336 : index
    %c0_11 = arith.constant 0 : index
    %21 = vector.load %arg2[%c336, %c0_11] : memref<544x256xbf16, #tpu.memory_space<vmem>>, vector<1x100xbf16>
    %22 = arith.extf %21 : vector<1x100xbf16> to vector<1x100xf32>
    %23 = vector.broadcast %22 : vector<1x100xf32> to vector<16x100xf32>
    %24 = arith.addf %20, %23 : vector<16x100xf32>
    %cst_12 = arith.constant 0.000000e+00 : f32
    %25 = vector.broadcast %cst_12 : f32 to vector<16x100xf32>
    %26 = arith.maximumf %24, %25 : vector<16x100xf32>
    %27 = arith.truncf %26 : vector<16x100xf32> to vector<16x100xbf16>
    %c352 = arith.constant 352 : index
    %c0_13 = arith.constant 0 : index
    %28 = vector.load %arg2[%c352, %c0_13] : memref<544x256xbf16, #tpu.memory_space<vmem>>, vector<100x40xbf16>
    %cst_14 = arith.constant dense<0.000000e+00> : vector<16x40xf32>
    %29 = tpu.matmul %27, %28, %cst_14 {dimension_numbers = #tpu.dot_dimension_numbers<[1], [0], [0], [1], [0, 0, 1, 1], [], []>} : vector<16x100xbf16>, vector<100x40xbf16>, vector<16x40xf32> -> vector<16x40xf32>
    %c464 = arith.constant 464 : index
    %c0_15 = arith.constant 0 : index
    %30 = vector.load %arg2[%c464, %c0_15] : memref<544x256xbf16, #tpu.memory_space<vmem>>, vector<1x40xbf16>
    %31 = arith.extf %30 : vector<1x40xbf16> to vector<1x40xf32>
    %32 = vector.broadcast %31 : vector<1x40xf32> to vector<16x40xf32>
    %33 = arith.addf %29, %32 : vector<16x40xf32>
    %cst_16 = arith.constant 0.000000e+00 : f32
    %34 = vector.broadcast %cst_16 : f32 to vector<16x40xf32>
    %35 = arith.maximumf %33, %34 : vector<16x40xf32>
    %36 = arith.truncf %35 : vector<16x40xf32> to vector<16x40xbf16>
    %c480 = arith.constant 480 : index
    %c0_17 = arith.constant 0 : index
    %37 = vector.load %arg2[%c480, %c0_17] : memref<544x256xbf16, #tpu.memory_space<vmem>>, vector<40x4xbf16>
    %cst_18 = arith.constant dense<0.000000e+00> : vector<16x4xf32>
    %38 = tpu.matmul %36, %37, %cst_18 {dimension_numbers = #tpu.dot_dimension_numbers<[1], [0], [0], [1], [0, 0, 1, 1], [], []>} : vector<16x40xbf16>, vector<40x4xbf16>, vector<16x4xf32> -> vector<16x4xf32>
    %c528 = arith.constant 528 : index
    %c0_19 = arith.constant 0 : index
    %39 = vector.load %arg2[%c528, %c0_19] : memref<544x256xbf16, #tpu.memory_space<vmem>>, vector<1x4xbf16>
    %40 = arith.extf %39 : vector<1x4xbf16> to vector<1x4xf32>
    %41 = vector.broadcast %40 : vector<1x4xf32> to vector<16x4xf32>
    %42 = arith.addf %38, %41 : vector<16x4xf32>
    %c0_20 = arith.constant 0 : index
    %c0_21 = arith.constant 0 : index
    %43 = vector.load %arg3[%c0_20, %c0_21] : memref<16x4xf32, #tpu.memory_space<vmem>>, vector<16x4xf32>
    tpu.vector_store %arg3[%c0_20, %c0_21], %42 {strides = array<i32>} : memref<16x4xf32, #tpu.memory_space<vmem>>, vector<16x4xf32>,
    return
  }
  func.func @transform_0(%arg0: i32) -> (i32, i32) {
    %c0_i32 = arith.constant 0 : i32
    %c0_i32_0 = arith.constant 0 : i32
    return %arg0, %c0_i32 : i32, i32
  }
  func.func @transform_1(%arg0: i32) -> (i32, i32) {
    %c0_i32 = arith.constant 0 : i32
    %c0_i32_0 = arith.constant 0 : i32
    %c0_i32_1 = arith.constant 0 : i32
    return %c0_i32, %c0_i32_0 : i32, i32
  }
  func.func @transform_2(%arg0: i32) -> (i32, i32) {
    %c0_i32 = arith.constant 0 : i32
    %c0_i32_0 = arith.constant 0 : i32
    return %arg0, %c0_i32 : i32, i32
  }
}

</mosaic_0001>

<llo_original>
// kernel: cntr_forward.1
$region0: #{cntr_forward.1}
  #allocation0 [shape = 'u32[]', space=smem, size = 0x4, offset = 0x4, fixed_abs, tag = 'smem constant byte address 0x4 - core index']
  #allocation1 [shape = 'u32[72,128]{1,0:T(1,128)}', space=vmem, size = 0x9000, scoped, tag = 'internal scratch']
  %s0 = inlined_call_operand.vmem [shape: bf16[16,50], index: 0, kind: input, shape index: {}]
  %s1 = inlined_call_operand.hbm [shape: bf16[544,256], index: 1, kind: input, shape index: {}]
  %s2 = inlined_call_operand.vmem [shape: f32[16,4], index: 2, kind: output, shape index: {}]
  %s3 = sld [smem:[#allocation0]]
  $region22: #{cntr_forward.1} parent=0
    _
  %s5 = ssub.s32 1, %s3
  %s6 = scalar_select 0, %s5, %s3
  $region1: #{cntr_forward.1} parent=0
    #allocation2 [shape = 'u8[278528]{0}', space=vmem, size = 0x44000, scoped, tag = 'input window, operand 1, single buffered']
    #allocation3 [shape = 's32[1]{0}', space=sflag, size = 0x4, scoped, tag = 'scoped memory for cntr_forward.1']
    %7 = vsyncpa [#allocation3], 0
    // Predicated region
    $region2: #{cntr_forward.1} parent=1 // pred_check
      _
    $region3: #{cntr_forward.1} parent=1 // pred_check_branch
      %9 = sbr.rel (0) target = $region5
    $region4: #{cntr_forward.1} parent=1 // pred_region
      _
    $region5: #{cntr_forward.1} parent=1 // pred_fallthru
      _
    // Predicated region
    $region6: #{cntr_forward.1} parent=1 // pred_check
      _
    $region7: #{cntr_forward.1} parent=1 // pred_check_branch
      %11 = sbr.rel (0) target = $region9
    $region8: #{cntr_forward.1} parent=1 // pred_region
      %13 = vsyncadd [#allocation3], 0
      %s14 = sshll.u32 %s1, 4
      %s15 = int_to_ptr.hbm [resolvable:$true] %s14
      %s16 = sshll.u32 [#allocation2], 4
      %s17 = int_to_ptr.vmem [resolvable:$true] %s16
      %22 = dma.hbm_to_vmem [thread:$0]  %s15, 8704, %s17, [#allocation3], 128, 128, 8
    $region9: #{cntr_forward.1} parent=1 // pred_fallthru
      _
    // Predicated region
    $region10: #{cntr_forward.1} parent=1 // pred_check
      _
    $region11: #{cntr_forward.1} parent=1 // pred_check_branch
      %24 = sbr.rel (0) target = $region13
    $region12: #{cntr_forward.1} parent=1 // pred_region
      %26 = dma.done [#allocation3], 8704
    $region13: #{cntr_forward.1} parent=1 // pred_fallthru
      _
    %v28 = vld [vmem:[%s0] sm:$0xf]
    %v29 = vld [vmem:[%s0 + $0x4] sm:$0xf]
    %v30 = vld [vmem:[#allocation2] sm:$0xf]
    %v31 = vld [vmem:[#allocation2 + $0x8] sm:$0xf]
    %v32 = vld [vmem:[#allocation2 + $0x10] sm:$0xf]
    %v33 = vld [vmem:[#allocation2 + $0x18] sm:$0xf]
    %v34 = vld [vmem:[#allocation2 + $0x20] sm:$0xf]
    %v35 = vld [vmem:[#allocation2 + $0x28] sm:$0xf]
    %v36 = vld [vmem:[#allocation2 + $0x30] sm:$0x1]
    %v37 = vld [vmem:[#allocation2 + $0x40] sm:$0x1]
    %v38 = vunpack.c.l.bf16 %v37
    %v39 = vperm.slane %v38, 0
    %v42 = vunpack.c.l.b16 %v28
    %v43 = vunpack.c.l.b16 %v29
    %v44 = vpack.c.b16 %v43, %v42
    %v52 = vunpack.c.l.b16 %v30
    %v53 = vunpack.c.l.b16 %v31
    %v54 = vunpack.c.l.b16 %v32
    %v55 = vunpack.c.l.b16 %v33
    %v56 = vunpack.c.l.b16 %v34
    %v57 = vunpack.c.l.b16 %v35
    %v58 = vunpack.c.l.b16 %v36
    %v59 = vpack.c.b16 %v53, %v52
    %v60 = vpack.c.b16 %v55, %v54
    %v61 = vpack.c.b16 %v57, %v56
    %v62 = vpack.c.b16 %v58, %v58
    %vm66 = vcmask 408576
    %v68 = vsel %vm66, %v44, 0
    %vm70 = vcmask 1040384
    %v72 = vsel %vm70, %v62, 0
    %74 = vmatpush.bf16.msra.mxu0 0
    %75 = vmatpush.bf16.msra.mxu0 0
    %76 = vmatpush.bf16.msra.mxu0 0
    %77 = vmatpush.bf16.msra.mxu0 0
    %78 = vmatpush.bf16.msra.mxu0 %v72
    %79 = vmatpush.bf16.msra.mxu0 %v61
    %80 = vmatpush.bf16.msra.mxu0 %v60
    %81 = vmatpush.bf16.msra.mxu0 %v59
    %82 = vmatmul.bf16.gmra.mxu0 %v68
    %v83 = vpop.f32.mrf.mxu0
    %v84 = vadd.f32 %v39, %v83
    %v85 = vpop.f32.mrf.mxu0
    %v86 = vadd.f32 %v39, %v85
    %87 = vdwg.mxu0
    %v88 = vmax.f32 %v84, 0.0
    %v89 = vmax.f32 %v86, 0.0
    %v90 = vpack.c.bf16 %v89, %v88
    %v91 = vld [vmem:[#allocation2 + $0x50] sm:$0xff]
    %v92 = vld [vmem:[#allocation2 + $0x58] sm:$0xff]
    %v93 = vld [vmem:[#allocation2 + $0x60] sm:$0xff]
    %v94 = vld [vmem:[#allocation2 + $0x68] sm:$0xff]
    %v95 = vld [vmem:[#allocation2 + $0x70] sm:$0xff]
    %v96 = vld [vmem:[#allocation2 + $0x78] sm:$0xff]
    %v97 = vld [vmem:[#allocation2 + $0x80] sm:$0xff]
    %v98 = vld [vmem:[#allocation2 + $0x88] sm:$0xff]
    %v99 = vld [vmem:[#allocation2 + $0x90] sm:$0xff]
    %v100 = vld [vmem:[#allocation2 + $0x98] sm:$0xff]
    %v101 = vld [vmem:[#allocation2 + $0xa0] sm:$0xff]
    %v102 = vld [vmem:[#allocation2 + $0xa8] sm:$0xff]
    %v103 = vld [vmem:[#allocation2 + $0xb0] sm:$0x11]
    %v104 = vunpack.c.l.bf16 %v103
    %v105 = vunpack.c.h.bf16 %v103
    %v106 = vperm.slane %v104, 0
    %v107 = vperm.slane %v105, 0
    %v120 = vunpack.c.l.b16 %v91
    %v121 = vunpack.c.h.b16 %v91
    %v122 = vunpack.c.l.b16 %v92
    %v123 = vunpack.c.h.b16 %v92
    %v124 = vunpack.c.l.b16 %v93
    %v125 = vunpack.c.h.b16 %v93
    %v126 = vunpack.c.l.b16 %v94
    %v127 = vunpack.c.h.b16 %v94
    %v128 = vunpack.c.l.b16 %v95
    %v129 = vunpack.c.h.b16 %v95
    %v130 = vunpack.c.l.b16 %v96
    %v131 = vunpack.c.h.b16 %v96
    %v132 = vunpack.c.l.b16 %v97
    %v133 = vunpack.c.h.b16 %v97
    %v134 = vunpack.c.l.b16 %v98
    %v135 = vunpack.c.h.b16 %v98
    %v136 = vunpack.c.l.b16 %v99
    %v137 = vunpack.c.h.b16 %v99
    %v138 = vunpack.c.l.b16 %v100
    %v139 = vunpack.c.h.b16 %v100
    %v140 = vunpack.c.l.b16 %v101
    %v141 = vunpack.c.h.b16 %v101
    %v142 = vunpack.c.l.b16 %v102
    %v143 = vunpack.c.h.b16 %v102
    %v144 = vpack.c.b16 %v122, %v120
    %v145 = vpack.c.b16 %v123, %v121
    %v146 = vpack.c.b16 %v126, %v124
    %v147 = vpack.c.b16 %v127, %v125
    %v148 = vpack.c.b16 %v130, %v128
    %v149 = vpack.c.b16 %v131, %v129
    %v150 = vpack.c.b16 %v134, %v132
    %v151 = vpack.c.b16 %v135, %v133
    %v152 = vpack.c.b16 %v138, %v136
    %v153 = vpack.c.b16 %v139, %v137
    %v154 = vpack.c.b16 %v142, %v140
    %v155 = vpack.c.b16 %v143, %v141
    %vm168 = vcmask 785408
    %v170 = vsel %vm168, %v90, 0
    %172 = vmatpush.bf16.msra.mxu0 0
    %173 = vmatpush.bf16.msra.mxu0 0
    %174 = vmatpush.bf16.msra.mxu0 %v154
    %175 = vmatpush.bf16.msra.mxu0 %v152
    %176 = vmatpush.bf16.msra.mxu0 %v150
    %177 = vmatpush.bf16.msra.mxu0 %v148
    %178 = vmatpush.bf16.msra.mxu0 %v146
    %179 = vmatpush.bf16.msra.mxu0 %v144
    %180 = vmatmul.bf16.gmra.mxu0 %v170
    %v181 = vpop.f32.mrf.mxu0
    %v182 = vadd.f32 %v106, %v181
    %v183 = vpop.f32.mrf.mxu0
    %v184 = vadd.f32 %v106, %v183
    %185 = vdwg.mxu0
    %186 = vmatpush.bf16.msra.mxu0 0
    %187 = vmatpush.bf16.msra.mxu0 0
    %188 = vmatpush.bf16.msra.mxu0 %v155
    %189 = vmatpush.bf16.msra.mxu0 %v153
    %190 = vmatpush.bf16.msra.mxu0 %v151
    %191 = vmatpush.bf16.msra.mxu0 %v149
    %192 = vmatpush.bf16.msra.mxu0 %v147
    %193 = vmatpush.bf16.msra.mxu0 %v145
    %194 = vmatmul.bf16.gmra.mxu0 %v170
    %v195 = vpop.f32.mrf.mxu0
    %v196 = vadd.f32 %v107, %v195
    %v197 = vpop.f32.mrf.mxu0
    %v198 = vadd.f32 %v107, %v197
    %199 = vdwg.mxu0
    %v200 = vmax.f32 %v182, 0.0
    %v201 = vmax.f32 %v196, 0.0
    %v202 = vmax.f32 %v184, 0.0
    %v203 = vmax.f32 %v198, 0.0
    %v204 = vpack.c.bf16 %v202, %v200
    %v205 = vpack.c.bf16 %v203, %v201
    %v206 = vld [vmem:[#allocation2 + $0xc0] sm:$0xf]
    %v207 = vld [vmem:[#allocation2 + $0xc8] sm:$0xf]
    %v208 = vld [vmem:[#allocation2 + $0xd0] sm:$0xf]
    %v209 = vld [vmem:[#allocation2 + $0xd8] sm:$0xf]
    %v210 = vld [vmem:[#allocation2 + $0xe0] sm:$0xf]
    %v211 = vld [vmem:[#allocation2 + $0xe8] sm:$0xf]
    %v212 = vld [vmem:[#allocation2 + $0xf0] sm:$0xf]
    %v213 = vld [vmem:[#allocation2 + $0xf8] sm:$0xf]
    %v214 = vld [vmem:[#allocation2 + $0x100] sm:$0xf]
    %v215 = vld [vmem:[#allocation2 + $0x108] sm:$0xf]
    %v216 = vld [vmem:[#allocation2 + $0x110] sm:$0xf]
    %v217 = vld [vmem:[#allocation2 + $0x118] sm:$0xf]
    %v218 = vld [vmem:[#allocation2 + $0x120] sm:$0xf]
    %v219 = vld [vmem:[#allocation2 + $0x128] sm:$0xf]
    %v220 = vld [vmem:[#allocation2 + $0x130] sm:$0xf]
    %v221 = vld [vmem:[#allocation2 + $0x138] sm:$0xf]
    %v222 = vld [vmem:[#allocation2 + $0x140] sm:$0xf]
    %v223 = vld [vmem:[#allocation2 + $0x148] sm:$0xf]
    %v224 = vld [vmem:[#allocation2 + $0x150] sm:$0x1]
    %v225 = vunpack.c.l.bf16 %v224
    %v226 = vperm.slane %v225, 0
    %v245 = vunpack.c.l.b16 %v206
    %v246 = vunpack.c.l.b16 %v207
    %v247 = vunpack.c.l.b16 %v208
    %v248 = vunpack.c.l.b16 %v209
    %v249 = vunpack.c.l.b16 %v210
    %v250 = vunpack.c.l.b16 %v211
    %v251 = vunpack.c.l.b16 %v212
    %v252 = vunpack.c.l.b16 %v213
    %v253 = vunpack.c.l.b16 %v214
    %v254 = vunpack.c.l.b16 %v215
    %v255 = vunpack.c.l.b16 %v216
    %v256 = vunpack.c.l.b16 %v217
    %v257 = vunpack.c.l.b16 %v218
    %v258 = vunpack.c.l.b16 %v219
    %v259 = vunpack.c.l.b16 %v220
    %v260 = vunpack.c.l.b16 %v221
    %v261 = vunpack.c.l.b16 %v222
    %v262 = vunpack.c.l.b16 %v223
    %v263 = vpack.c.b16 %v246, %v245
    %v264 = vpack.c.b16 %v248, %v247
    %v265 = vpack.c.b16 %v250, %v249
    %v266 = vpack.c.b16 %v252, %v251
    %v267 = vpack.c.b16 %v254, %v253
    %v268 = vpack.c.b16 %v256, %v255
    %v269 = vpack.c.b16 %v258, %v257
    %v270 = vpack.c.b16 %v260, %v259
    %v271 = vpack.c.b16 %v262, %v261
    %vm281 = vcmask 130048
    %v283 = vsel %vm281, %v205, 0
    %285 = vmatpush.bf16.msra.mxu0 %v270
    %286 = vmatpush.bf16.msra.mxu0 %v269
    %287 = vmatpush.bf16.msra.mxu0 %v268
    %288 = vmatpush.bf16.msra.mxu0 %v267
    %289 = vmatpush.bf16.msra.mxu0 %v266
    %290 = vmatpush.bf16.msra.mxu0 %v265
    %291 = vmatpush.bf16.msra.mxu0 %v264
    %292 = vmatpush.bf16.msra.mxu0 %v263
    %293 = vmatmul.bf16.gmra.mxu0 %v204
    %v294 = vpop.f32.mrf.mxu0
    %v295 = vadd.f32 %v226, %v294
    %v296 = vpop.f32.mrf.mxu0
    %v297 = vadd.f32 %v226, %v296
    %298 = vdwg.mxu0
    %299 = vmatpush.bf16.msra.mxu0 0
    %300 = vmatpush.bf16.msra.mxu0 0
    %301 = vmatpush.bf16.msra.mxu0 0
    %302 = vmatpush.bf16.msra.mxu0 0
    %303 = vmatpush.bf16.msra.mxu0 0
    %304 = vmatpush.bf16.msra.mxu0 0
    %305 = vmatpush.bf16.msra.mxu0 0
    %306 = vmatpush.bf16.msra.mxu0 %v271
    %307 = vmatmul.bf16.gmra.mxu0 %v283
    %v308 = vpop.f32.mrf.mxu0
    %v309 = vadd.f32 %v295, %v308
    %v310 = vpop.f32.mrf.mxu0
    %v311 = vadd.f32 %v297, %v310
    %312 = vdwg.mxu0
    %v313 = vmax.f32 %v309, 0.0
    %v314 = vmax.f32 %v311, 0.0
    %v315 = vpack.c.bf16 %v314, %v313
    %v316 = vld [vmem:[#allocation2 + $0x160] sm:$0xf]
    %v317 = vld [vmem:[#allocation2 + $0x168] sm:$0xf]
    %v318 = vld [vmem:[#allocation2 + $0x170] sm:$0xf]
    %v319 = vld [vmem:[#allocation2 + $0x178] sm:$0xf]
    %v320 = vld [vmem:[#allocation2 + $0x180] sm:$0xf]
    %v321 = vld [vmem:[#allocation2 + $0x188] sm:$0xf]
    %v322 = vld [vmem:[#allocation2 + $0x190] sm:$0xf]
    %v323 = vld [vmem:[#allocation2 + $0x198] sm:$0xf]
    %v324 = vld [vmem:[#allocation2 + $0x1a0] sm:$0xf]
    %v325 = vld [vmem:[#allocation2 + $0x1a8] sm:$0xf]
    %v326 = vld [vmem:[#allocation2 + $0x1b0] sm:$0xf]
    %v327 = vld [vmem:[#allocation2 + $0x1b8] sm:$0xf]
    %v328 = vld [vmem:[#allocation2 + $0x1c0] sm:$0x3]
    %v329 = vld [vmem:[#allocation2 + $0x1d0] sm:$0x1]
    %v330 = vunpack.c.l.bf16 %v329
    %v331 = vperm.slane %v330, 0
    %v345 = vunpack.c.l.b16 %v316
    %v346 = vunpack.c.l.b16 %v317
    %v347 = vunpack.c.l.b16 %v318
    %v348 = vunpack.c.l.b16 %v319
    %v349 = vunpack.c.l.b16 %v320
    %v350 = vunpack.c.l.b16 %v321
    %v351 = vunpack.c.l.b16 %v322
    %v352 = vunpack.c.l.b16 %v323
    %v353 = vunpack.c.l.b16 %v324
    %v354 = vunpack.c.l.b16 %v325
    %v355 = vunpack.c.l.b16 %v326
    %v356 = vunpack.c.l.b16 %v327
    %v357 = vunpack.c.l.b16 %v328
    %v358 = vpack.c.b16 %v346, %v345
    %v359 = vpack.c.b16 %v348, %v347
    %v360 = vpack.c.b16 %v350, %v349
    %v361 = vpack.c.b16 %v352, %v351
    %v362 = vpack.c.b16 %v354, %v353
    %v363 = vpack.c.b16 %v356, %v355
    %v364 = vpack.c.b16 %v357, %v357
    %vm371 = vcmask 818176
    %v373 = vsel %vm371, %v315, 0
    %vm375 = vcmask 1041408
    %v377 = vsel %vm375, %v364, 0
    %379 = vmatpush.bf16.msra.mxu0 0
    %380 = vmatpush.bf16.msra.mxu0 %v377
    %381 = vmatpush.bf16.msra.mxu0 %v363
    %382 = vmatpush.bf16.msra.mxu0 %v362
    %383 = vmatpush.bf16.msra.mxu0 %v361
    %384 = vmatpush.bf16.msra.mxu0 %v360
    %385 = vmatpush.bf16.msra.mxu0 %v359
    %386 = vmatpush.bf16.msra.mxu0 %v358
    %387 = vmatmul.bf16.gmra.mxu0 %v373
    %v388 = vpop.f32.mrf.mxu0
    %v389 = vadd.f32 %v331, %v388
    %v390 = vpop.f32.mrf.mxu0
    %v391 = vadd.f32 %v331, %v390
    %392 = vdwg.mxu0
    %v393 = vmax.f32 %v389, 0.0
    %v394 = vmax.f32 %v391, 0.0
    %v395 = vpack.c.bf16 %v394, %v393
    %v396 = vld [vmem:[#allocation2 + $0x1e0] sm:$0xf]
    %v397 = vld [vmem:[#allocation2 + $0x1e8] sm:$0xf]
    %v398 = vld [vmem:[#allocation2 + $0x1f0] sm:$0xf]
    %v399 = vld [vmem:[#allocation2 + $0x1f8] sm:$0xf]
    %v400 = vld [vmem:[#allocation2 + $0x200] sm:$0xf]
    %v401 = vld [vmem:[#allocation2 + $0x210] sm:$0x1]
    %v402 = vunpack.c.l.bf16 %v401
    %v403 = vperm.slane %v402, 0
    %v409 = vunpack.c.l.b16 %v396
    %v410 = vunpack.c.l.b16 %v397
    %v411 = vunpack.c.l.b16 %v398
    %v412 = vunpack.c.l.b16 %v399
    %v413 = vunpack.c.l.b16 %v400
    %v414 = vpack.c.b16 %v410, %v409
    %v415 = vpack.c.b16 %v412, %v411
    %v416 = vpack.c.b16 %v413, %v413
    %vm419 = vcmask 326656
    %v421 = vsel %vm419, %v395, 0
    %vm423 = vcmask 1043456
    %v425 = vsel %vm423, %v416, 0
    %427 = vmatpush.bf16.msra.mxu0 0
    %428 = vmatpush.bf16.msra.mxu0 0
    %429 = vmatpush.bf16.msra.mxu0 0
    %430 = vmatpush.bf16.msra.mxu0 0
    %431 = vmatpush.bf16.msra.mxu0 0
    %432 = vmatpush.bf16.msra.mxu0 %v425
    %433 = vmatpush.bf16.msra.mxu0 %v415
    %434 = vmatpush.bf16.msra.mxu0 %v414
    %435 = vmatmul.bf16.gmra.mxu0 %v421
    %v436 = vpop.f32.mrf.mxu0
    %v437 = vadd.f32 %v403, %v436
    %v438 = vpop.f32.mrf.mxu0
    %v439 = vadd.f32 %v403, %v438
    %440 = vdwg.mxu0
    %vm441 = vcmask 31744
    %442 = vst.msk [vmem:[%s2] sm:$0xff] %vm441, %v437
    %443 = vst.msk [vmem:[%s2 + $0x8] sm:$0xff] %vm441, %v439
    // Predicated region
    $region14: #{cntr_forward.1} parent=1 // pred_check
      _
    $region15: #{cntr_forward.1} parent=1 // pred_check_branch
      %445 = sbr.rel (0) target = $region17
    $region16: #{cntr_forward.1} parent=1 // pred_region
      _
    $region17: #{cntr_forward.1} parent=1 // pred_fallthru
      _
    // Predicated region
    $region18: #{cntr_forward.1} parent=1 // pred_check
      _
    $region19: #{cntr_forward.1} parent=1 // pred_check_branch
      %447 = sbr.rel (0) target = $region21
    $region20: #{cntr_forward.1} parent=1 // pred_region
      _
    $region21: #{cntr_forward.1} parent=1 // pred_fallthru
      _
    %448 = vsyncpa [#allocation3], 1

</llo_original>
